<compile_context>
chip_gen: v7x
topology: tpu7x:2x2x1
jax: 0.10.0
libtpu: 0.0.40
codegen_flags: <defaults>
</compile_context>

<pallas_src>
import functools

import jax
import jax.numpy as jnp
from jax.experimental import pallas as pl
from jax.experimental.pallas import tpu as pltpu


def _round_up(x, m):
    return (x + m - 1) // m * m


def _head_kernel(x_ref, w1_ref, b1_ref, w2_ref, b2_ref, o_ref,
                 h_scr, m_scr, l_scr, logits_scr, *, tn, nvt):
    # Grid: (row_tiles, vocab_tiles).  Per row tile i, j sweeps vocab tiles.
    #   x_ref:  (tm, d_model_p)   bf16, resident across j
    #   w1_ref: (d_model_p, dff_p) bf16 (constant block), b1_ref: (1, dff_p) f32
    #   w2_ref: (dff_p, tn) bf16 streamed over j, b2_ref: (1, tn) f32
    #   o_ref:  (tm, vocab_p) f32, resident across j (written on last j only)
    #   h_scr:  (tm, dff_p) bf16  -- ReLU(x @ w1 + b1), reused across vocab tiles
    #   m_scr, l_scr: (tm, 1) f32 -- online max / sum-exp accumulators
    #   logits_scr: (nvt, tm, tn) f32 -- raw logits strips kept for finalize
    j = pl.program_id(1)

    @pl.when(j == 0)
    def _():
        h = jnp.dot(x_ref[...], w1_ref[...], preferred_element_type=jnp.float32)
        h = jnp.maximum(h + b1_ref[...], 0.0)          # Dropout = identity (eval)
        h_scr[...] = h.astype(h_scr.dtype)
        m_scr[...] = jnp.full_like(m_scr, -jnp.inf)
        l_scr[...] = jnp.zeros_like(l_scr)

    # Second matmul on the current vocab strip (bf16 operands, f32 accumulate).
    logits = jnp.dot(h_scr[...], w2_ref[...], preferred_element_type=jnp.float32)
    logits = logits + b2_ref[...]
    logits_scr[j] = logits

    # Online (flash-style) max / logsumexp update.
    m_prev = m_scr[...]
    m_new = jnp.maximum(m_prev, jnp.max(logits, axis=-1, keepdims=True))
    l_scr[...] = l_scr[...] * jnp.exp(m_prev - m_new) + jnp.sum(
        jnp.exp(logits - m_new), axis=-1, keepdims=True)
    m_scr[...] = m_new

    @pl.when(j == nvt - 1)
    def _():
        lse = m_scr[...] + jnp.log(l_scr[...])
        # Static unroll over vocab strips -> static, lane-aligned output stores.
        for k in range(nvt):
            o_ref[:, k * tn:(k + 1) * tn] = (
                logits_scr[k] - lse).astype(o_ref.dtype)


def pdfreader_head(vy_flat, w1, b1, w2, b2, *, tm=256, tn=512,
                   compute_dtype=jnp.bfloat16,
                   vmem_limit_bytes=48 * 1024 * 1024):
    """vy_flat: [N, d_model] f32 -> [N, vocab] f32 log-probs."""
    n, d_model = vy_flat.shape
    dff = w1.shape[1]
    vocab = w2.shape[1]
    f32 = jnp.float32

    # Pad contraction dims to full 128-lane MXU width; tile vocab by tn lanes.
    dm_p = _round_up(d_model, 128)
    dff_p = _round_up(dff, 128)
    tn = min(_round_up(tn, 128), _round_up(vocab, 128))
    vocab_p = _round_up(vocab, tn)
    nvt = vocab_p // tn

    # Row tile: as large as requested, clipped to the (sublane-padded) row count.
    tm = max(8, min(_round_up(tm, 8), _round_up(n, 8)))
    rows = pl.cdiv(n, tm)
    n_p = rows * tm

    # Zero-pad activations/weights; padded vocab columns get a huge negative
    # bias so they contribute ~0 to the softmax normalizer.
    x_p = jnp.zeros((n_p, dm_p), compute_dtype).at[:n, :d_model].set(
        vy_flat.astype(compute_dtype))
    w1_p = jnp.zeros((dm_p, dff_p), compute_dtype).at[:d_model, :dff].set(
        w1.astype(compute_dtype))
    b1_p = jnp.zeros((1, dff_p), f32).at[:, :dff].set(
        b1.astype(f32).reshape(1, dff))
    w2_p = jnp.zeros((dff_p, vocab_p), compute_dtype).at[:dff, :vocab].set(
        w2.astype(compute_dtype))
    b2_p = jnp.full((1, vocab_p), -1e30, f32).at[:, :vocab].set(
        b2.astype(f32).reshape(1, vocab))

    kernel = functools.partial(_head_kernel, tn=tn, nvt=nvt)

    out = pl.pallas_call(
        kernel,
        out_shape=jax.ShapeDtypeStruct((n_p, vocab_p), jnp.float32),
        grid_spec=pltpu.PrefetchScalarGridSpec(
            num_scalar_prefetch=0,
            grid=(rows, nvt),
            in_specs=[
                pl.BlockSpec((tm, dm_p), lambda i, j: (i, 0)),      # x (resident over j)
                pl.BlockSpec((dm_p, dff_p), lambda i, j: (0, 0)),   # w1 (constant block)
                pl.BlockSpec((1, dff_p), lambda i, j: (0, 0)),      # b1
                pl.BlockSpec((dff_p, tn), lambda i, j: (0, j)),     # w2 (streamed)
                pl.BlockSpec((1, tn), lambda i, j: (0, j)),         # b2 (streamed)
            ],
            out_specs=pl.BlockSpec((tm, vocab_p), lambda i, j: (i, 0)),
            scratch_shapes=[
                pltpu.VMEM((tm, dff_p), compute_dtype),   # h = ReLU(x@w1+b1)
                pltpu.VMEM((tm, 1), jnp.float32),          # running max
                pltpu.VMEM((tm, 1), jnp.float32),          # running sum-exp
                pltpu.VMEM((nvt, tm, tn), jnp.float32),    # raw logits strips
            ],
        ),
        compiler_params=pltpu.CompilerParams(
            dimension_semantics=("parallel", "arbitrary"),
            vmem_limit_bytes=vmem_limit_bytes,
        ),
    )(x_p, w1_p, b1_p, w2_p, b2_p)

    return out[:n, :vocab]


def stand_in_encoder(x, y, enc_wx, enc_wy):
    # Deterministic stand-in for the injected encoder module (plain JAX glue).
    vx = jnp.tanh(jnp.einsum("bsd,de->bse", x, enc_wx))
    vy = jnp.tanh(jnp.einsum("bsd,de->bse", y, enc_wy))
    return vx, vy


def pdfreader_forward(x, y, params, *, tm=256, tn=512,
                      compute_dtype=jnp.bfloat16):
    vx, vy = stand_in_encoder(x, y, params["enc_wx"], params["enc_wy"])
    b, s, d = vy.shape
    out = pdfreader_head(vy.reshape(b * s, d), params["w1"], params["b1"],
                         params["w2"], params["b2"], tm=tm, tn=tn,
                         compute_dtype=compute_dtype)
    return out.reshape(b, s, -1)


def reference_forward(x, y, params, compute_dtype=jnp.float32):
    vx, vy = stand_in_encoder(x, y, params["enc_wx"], params["enc_wy"])
    cd = compute_dtype
    h = jnp.einsum("bsd,de->bse", vy.astype(cd), params["w1"].astype(cd),
                   preferred_element_type=jnp.float32) + params["b1"]
    h = jnp.maximum(h, 0.0).astype(cd)
    logits = jnp.einsum("bse,ev->bsv", h, params["w2"].astype(cd),
                        preferred_element_type=jnp.float32) + params["b2"]
    return jax.nn.log_softmax(logits.astype(jnp.float32), axis=-1)


if __name__ == "__main__":
    # Small shapes consistent with the module (d_model, dim_feedforward, vocab).
    B, S = 2, 8
    D_IN = 16          # raw input feature dim fed to the stand-in encoder
    D_MODEL = 32       # d_model
    DFF = 64           # dim_feedforward
    VOCAB = 256        # vocab_size

    key = jax.random.PRNGKey(0)
    kx, ky, kex, key_, k1, kb1, k2, kb2 = jax.random.split(key, 8)

    x = jax.random.normal(kx, (B, S, D_IN), dtype=jnp.float32)
    y = jax.random.normal(ky, (B, S, D_IN), dtype=jnp.float32)

    params = {
        "enc_wx": jax.random.normal(kex, (D_IN, D_MODEL), jnp.float32) * 0.1,
        "enc_wy": jax.random.normal(key_, (D_IN, D_MODEL), jnp.float32) * 0.1,
        # nn.Linear weights, stored [in, out]; deterministic init
        "w1": jax.random.normal(k1, (D_MODEL, DFF), jnp.float32) * (1.0 / D_MODEL ** 0.5),
        "b1": jax.random.normal(kb1, (1, DFF), jnp.float32) * 0.01,
        "w2": jax.random.normal(k2, (DFF, VOCAB), jnp.float32) * (1.0 / DFF ** 0.5),
        "b2": jax.random.normal(kb2, (1, VOCAB), jnp.float32) * 0.01,
    }

    # tn=128 -> 2 vocab tiles, exercising the online log-softmax path.
    out = jax.block_until_ready(pdfreader_forward(x, y, params, tn=128))

    ref_matched = jax.block_until_ready(
        reference_forward(x, y, params, compute_dtype=jnp.bfloat16))
    ref_f32 = jax.block_until_ready(
        reference_forward(x, y, params, compute_dtype=jnp.float32))

    assert out.shape == (B, S, VOCAB), out.shape
    # Precision-matched (bf16 operands, f32 accumulate) reference: tight check.
    err_matched = float(jnp.max(jnp.abs(out - ref_matched)))
    assert jnp.allclose(out, ref_matched, atol=1e-3, rtol=1e-3), err_matched
    # Full-f32 reference: loose sanity check (bf16 operand rounding).
    err_f32 = float(jnp.max(jnp.abs(out - ref_f32)))
    assert jnp.allclose(out, ref_f32, atol=5e-2, rtol=5e-2), err_f32
    # log-softmax sanity: rows sum to 1 in prob space.
    assert jnp.allclose(jnp.sum(jnp.exp(out), axis=-1), 1.0, atol=1e-3)

    print("KERNEL_OK")
</pallas_src>

<mosaic_0001>
module attributes {stable_mosaic.version = 11 : i64} {
  func.func @_head_kernel(%arg0: i32, %arg1: i32, %arg2: memref<16x128xbf16, #tpu.memory_space<vmem>>, %arg3: memref<128x128xbf16, #tpu.memory_space<vmem>>, %arg4: memref<1x128xf32, #tpu.memory_space<vmem>>, %arg5: memref<128x128xbf16, #tpu.memory_space<vmem>>, %arg6: memref<1x128xf32, #tpu.memory_space<vmem>>, %arg7: memref<16x256xf32, #tpu.memory_space<vmem>>, %arg8: memref<16x128xbf16, #tpu.memory_space<vmem>>, %arg9: memref<16x1xf32, #tpu.memory_space<vmem>>, %arg10: memref<16x1xf32, #tpu.memory_space<vmem>>, %arg11: memref<2x16x128xf32, #tpu.memory_space<vmem>>) attributes {dimension_semantics = [#tpu.dimension_semantics<parallel>, #tpu.dimension_semantics<arbitrary>], iteration_bounds = array<i64: 1, 2>, scalar_prefetch = 0 : i64, scratch_operands = 4 : i64, tpu.core_type = #tpu.core_type<tc>, window_params = [{transform_indices = @transform_0, window_bounds = array<i64: 16, 128>}, {pipeline_mode = #tpu.pipeline_mode<synchronous>, transform_indices = @transform_1, window_bounds = array<i64: 128, 128>}, {pipeline_mode = #tpu.pipeline_mode<synchronous>, transform_indices = @transform_2, window_bounds = array<i64: 1, 128>}, {transform_indices = @transform_3, window_bounds = array<i64: 128, 128>}, {transform_indices = @transform_4, window_bounds = array<i64: 1, 128>}, {transform_indices = @transform_5, window_bounds = array<i64: 16, 256>}]} {
    %c0_i32 = arith.constant 0 : i32
    %0 = arith.cmpi eq, %arg1, %c0_i32 : i32
    %1 = arith.extui %0 : i1 to i32
    %c0_i32_0 = arith.constant 0 : i32
    %2 = arith.cmpi ne, %1, %c0_i32_0 : i32
    scf.if %2 {
      %c0_19 = arith.constant 0 : index
      %c0_20 = arith.constant 0 : index
      %32 = vector.load %arg2[%c0_19, %c0_20] : memref<16x128xbf16, #tpu.memory_space<vmem>>, vector<16x128xbf16>
      %c0_21 = arith.constant 0 : index
      %c0_22 = arith.constant 0 : index
      %33 = vector.load %arg3[%c0_21, %c0_22] : memref<128x128xbf16, #tpu.memory_space<vmem>>, vector<128x128xbf16>
      %cst_23 = arith.constant dense<0.000000e+00> : vector<16x128xf32>
      %34 = tpu.matmul %32, %33, %cst_23 {dimension_numbers = #tpu.dot_dimension_numbers<[1], [0], [0], [1], [0, 0, 1, 1], [], []>} : vector<16x128xbf16>, vector<128x128xbf16>, vector<16x128xf32> -> vector<16x128xf32>
      %c0_24 = arith.constant 0 : index
      %c0_25 = arith.constant 0 : index
      %35 = vector.load %arg4[%c0_24, %c0_25] : memref<1x128xf32, #tpu.memory_space<vmem>>, vector<1x128xf32>
      %36 = vector.broadcast %35 : vector<1x128xf32> to vector<16x128xf32>
      %37 = arith.addf %34, %36 : vector<16x128xf32>
      %cst_26 = arith.constant 0.000000e+00 : f32
      %38 = vector.broadcast %cst_26 : f32 to vector<16x128xf32>
      %39 = arith.maximumf %37, %38 : vector<16x128xf32>
      %40 = arith.truncf %39 : vector<16x128xf32> to vector<16x128xbf16>
      %c0_27 = arith.constant 0 : index
      %c0_28 = arith.constant 0 : index
      %41 = vector.load %arg8[%c0_27, %c0_28] : memref<16x128xbf16, #tpu.memory_space<vmem>>, vector<16x128xbf16>
      tpu.vector_store %arg8[%c0_27, %c0_28], %40 {strides = array<i32>} : memref<16x128xbf16, #tpu.memory_space<vmem>>, vector<16x128xbf16>,
      %cst_29 = arith.constant 0xFF800000 : f32
      %42 = vector.broadcast %cst_29 : f32 to vector<16x1xf32>
      %c0_30 = arith.constant 0 : index
      %c0_31 = arith.constant 0 : index
      %43 = vector.load %arg9[%c0_30, %c0_31] : memref<16x1xf32, #tpu.memory_space<vmem>>, vector<16x1xf32>
      tpu.vector_store %arg9[%c0_30, %c0_31], %42 {strides = array<i32>} : memref<16x1xf32, #tpu.memory_space<vmem>>, vector<16x1xf32>,
      %cst_32 = arith.constant 0.000000e+00 : f32
      %44 = vector.broadcast %cst_32 : f32 to vector<16x1xf32>
      %c0_33 = arith.constant 0 : index
      %c0_34 = arith.constant 0 : index
      %45 = vector.load %arg10[%c0_33, %c0_34] : memref<16x1xf32, #tpu.memory_space<vmem>>, vector<16x1xf32>
      tpu.vector_store %arg10[%c0_33, %c0_34], %44 {strides = array<i32>} : memref<16x1xf32, #tpu.memory_space<vmem>>, vector<16x1xf32>,
    } else {
    }
    %c0 = arith.constant 0 : index
    %c0_1 = arith.constant 0 : index
    %3 = vector.load %arg8[%c0, %c0_1] : memref<16x128xbf16, #tpu.memory_space<vmem>>, vector<16x128xbf16>
    %c0_2 = arith.constant 0 : index
    %c0_3 = arith.constant 0 : index
    %4 = vector.load %arg5[%c0_2, %c0_3] : memref<128x128xbf16, #tpu.memory_space<vmem>>, vector<128x128xbf16>
    %cst = arith.constant dense<0.000000e+00> : vector<16x128xf32>
    %5 = tpu.matmul %3, %4, %cst {dimension_numbers = #tpu.dot_dimension_numbers<[1], [0], [0], [1], [0, 0, 1, 1], [], []>} : vector<16x128xbf16>, vector<128x128xbf16>, vector<16x128xf32> -> vector<16x128xf32>
    %c0_4 = arith.constant 0 : index
    %c0_5 = arith.constant 0 : index
    %6 = vector.load %arg6[%c0_4, %c0_5] : memref<1x128xf32, #tpu.memory_space<vmem>>, vector<1x128xf32>
    %7 = vector.broadcast %6 : vector<1x128xf32> to vector<16x128xf32>
    %8 = arith.addf %5, %7 : vector<16x128xf32>
    %9 = arith.index_cast %arg1 : i32 to index
    %c0_6 = arith.constant 0 : index
    %c0_7 = arith.constant 0 : index
    %10 = vector.load %arg11[%9, %c0_6, %c0_7] : memref<2x16x128xf32, #tpu.memory_space<vmem>>, vector<1x16x128xf32>
    %11 = vector.shape_cast %10 : vector<1x16x128xf32> to vector<16x128xf32>
    %12 = vector.shape_cast %8 : vector<16x128xf32> to vector<1x16x128xf32>
    tpu.vector_store %arg11[%9, %c0_6, %c0_7], %12 {strides = array<i32>} : memref<2x16x128xf32, #tpu.memory_space<vmem>>, vector<1x16x128xf32>,
    %c0_8 = arith.constant 0 : index
    %c0_9 = arith.constant 0 : index
    %13 = vector.load %arg9[%c0_8, %c0_9] : memref<16x1xf32, #tpu.memory_space<vmem>>, vector<16x1xf32>
    %cst_10 = arith.constant dense<0xFF800000> : vector<16xf32>
    %14 = vector.multi_reduction <maximumf>, %8, %cst_10 [1] : vector<16x128xf32> to vector<16xf32>
    %15 = vector.shape_cast %14 : vector<16xf32> to vector<16x1xf32>
    %16 = arith.maximumf %13, %15 : vector<16x1xf32>
    %c0_11 = arith.constant 0 : index
    %c0_12 = arith.constant 0 : index
    %17 = vector.load %arg10[%c0_11, %c0_12] : memref<16x1xf32, #tpu.memory_space<vmem>>, vector<16x1xf32>
    %18 = arith.subf %13, %16 : vector<16x1xf32>
    %19 = math.exp %18 : vector<16x1xf32>
    %20 = arith.mulf %17, %19 : vector<16x1xf32>
    %21 = vector.broadcast %16 : vector<16x1xf32> to vector<16x128xf32>
    %22 = arith.subf %8, %21 : vector<16x128xf32>
    %23 = math.exp %22 : vector<16x128xf32>
    %cst_13 = arith.constant dense<0.000000e+00> : vector<16xf32>
    %24 = vector.multi_reduction <add>, %23, %cst_13 [1] : vector<16x128xf32> to vector<16xf32>
    %25 = vector.shape_cast %24 : vector<16xf32> to vector<16x1xf32>
    %26 = arith.addf %20, %25 : vector<16x1xf32>
    %c0_14 = arith.constant 0 : index
    %c0_15 = arith.constant 0 : index
    %27 = vector.load %arg10[%c0_14, %c0_15] : memref<16x1xf32, #tpu.memory_space<vmem>>, vector<16x1xf32>
    tpu.vector_store %arg10[%c0_14, %c0_15], %26 {strides = array<i32>} : memref<16x1xf32, #tpu.memory_space<vmem>>, vector<16x1xf32>,
    %c0_16 = arith.constant 0 : index
    %c0_17 = arith.constant 0 : index
    %28 = vector.load %arg9[%c0_16, %c0_17] : memref<16x1xf32, #tpu.memory_space<vmem>>, vector<16x1xf32>
    tpu.vector_store %arg9[%c0_16, %c0_17], %16 {strides = array<i32>} : memref<16x1xf32, #tpu.memory_space<vmem>>, vector<16x1xf32>,
    %c1_i32 = arith.constant 1 : i32
    %29 = arith.cmpi eq, %arg1, %c1_i32 : i32
    %30 = arith.extui %29 : i1 to i32
    %c0_i32_18 = arith.constant 0 : i32
    %31 = arith.cmpi ne, %30, %c0_i32_18 : i32
    scf.if %31 {
      %c0_19 = arith.constant 0 : index
      %c0_20 = arith.constant 0 : index
      %32 = vector.load %arg9[%c0_19, %c0_20] : memref<16x1xf32, #tpu.memory_space<vmem>>, vector<16x1xf32>
      %c0_21 = arith.constant 0 : index
      %c0_22 = arith.constant 0 : index
      %33 = vector.load %arg10[%c0_21, %c0_22] : memref<16x1xf32, #tpu.memory_space<vmem>>, vector<16x1xf32>
      %34 = math.log %33 : vector<16x1xf32>
      %35 = arith.addf %32, %34 : vector<16x1xf32>
      %c0_23 = arith.constant 0 : index
      %c0_24 = arith.constant 0 : index
      %c0_25 = arith.constant 0 : index
      %36 = vector.load %arg11[%c0_23, %c0_24, %c0_25] : memref<2x16x128xf32, #tpu.memory_space<vmem>>, vector<1x16x128xf32>
      %37 = vector.shape_cast %36 : vector<1x16x128xf32> to vector<16x128xf32>
      %38 = vector.broadcast %35 : vector<16x1xf32> to vector<16x128xf32>
      %39 = arith.subf %37, %38 : vector<16x128xf32>
      %c0_26 = arith.constant 0 : index
      %c0_27 = arith.constant 0 : index
      %40 = vector.load %arg7[%c0_26, %c0_27] : memref<16x256xf32, #tpu.memory_space<vmem>>, vector<16x128xf32>
      tpu.vector_store %arg7[%c0_26, %c0_27], %39 {strides = array<i32>} : memref<16x256xf32, #tpu.memory_space<vmem>>, vector<16x128xf32>,
      %c1 = arith.constant 1 : index
      %c0_28 = arith.constant 0 : index
      %c0_29 = arith.constant 0 : index
      %41 = vector.load %arg11[%c1, %c0_28, %c0_29] : memref<2x16x128xf32, #tpu.memory_space<vmem>>, vector<1x16x128xf32>
      %42 = vector.shape_cast %41 : vector<1x16x128xf32> to vector<16x128xf32>
      %43 = vector.broadcast %35 : vector<16x1xf32> to vector<16x128xf32>
      %44 = arith.subf %42, %43 : vector<16x128xf32>
      %c0_30 = arith.constant 0 : index
      %c128 = arith.constant 128 : index
      %45 = vector.load %arg7[%c0_30, %c128] : memref<16x256xf32, #tpu.memory_space<vmem>>, vector<16x128xf32>
      tpu.vector_store %arg7[%c0_30, %c128], %44 {strides = array<i32>} : memref<16x256xf32, #tpu.memory_space<vmem>>, vector<16x128xf32>,
    } else {
    }
    return
  }
  func.func @transform_0(%arg0: i32, %arg1: i32) -> (i32, i32) {
    %c0_i32 = arith.constant 0 : i32
    %c0_i32_0 = arith.constant 0 : i32
    return %arg0, %c0_i32 : i32, i32
  }
  func.func @transform_1(%arg0: i32, %arg1: i32) -> (i32, i32) {
    %c0_i32 = arith.constant 0 : i32
    %c0_i32_0 = arith.constant 0 : i32
    %c0_i32_1 = arith.constant 0 : i32
    return %c0_i32, %c0_i32_0 : i32, i32
  }
  func.func @transform_2(%arg0: i32, %arg1: i32) -> (i32, i32) {
    %c0_i32 = arith.constant 0 : i32
    %c0_i32_0 = arith.constant 0 : i32
    %c0_i32_1 = arith.constant 0 : i32
    return %c0_i32, %c0_i32_0 : i32, i32
  }
  func.func @transform_3(%arg0: i32, %arg1: i32) -> (i32, i32) {
    %c0_i32 = arith.constant 0 : i32
    %c0_i32_0 = arith.constant 0 : i32
    return %c0_i32, %arg1 : i32, i32
  }
  func.func @transform_4(%arg0: i32, %arg1: i32) -> (i32, i32) {
    %c0_i32 = arith.constant 0 : i32
    %c0_i32_0 = arith.constant 0 : i32
    return %c0_i32, %arg1 : i32, i32
  }
  func.func @transform_5(%arg0: i32, %arg1: i32) -> (i32, i32) {
    %c0_i32 = arith.constant 0 : i32
    %c0_i32_0 = arith.constant 0 : i32
    return %arg0, %c0_i32 : i32, i32
  }
}

</mosaic_0001>

<llo_original>
// kernel: tpu_custom_call.1
$region0: #{tpu_custom_call.1}
  #allocation0 [shape = 'u32[]', space=smem, size = 0x4, offset = 0x4, fixed_abs, tag = 'smem constant byte address 0x4 - core index']
  #allocation1 [shape = 'u32[144,128]{1,0:T(1,128)}', space=vmem, size = 0x12000, scoped, tag = 'internal scratch']
  #allocation2 [shape = 'bf16[16,128]{1,0:T(16,128)(2,1)}', space=vmem, size = 0x1000, scoped, tag = 'scratch operand']
  #allocation3 [shape = 'f32[16,1]{1,0:T(8,128)}', space=vmem, size = 0x2000, scoped, tag = 'scratch operand']
  #allocation4 [shape = 'f32[16,1]{1,0:T(8,128)}', space=vmem, size = 0x2000, scoped, tag = 'scratch operand']
  #allocation5 [shape = 'f32[2,16,128]{2,1,0:T(8,128)}', space=vmem, size = 0x4000, scoped, tag = 'scratch operand']
  %s0 = inlined_call_operand.hbm [shape: bf16[16,128], index: 0, kind: input, shape index: {}]
  %s1 = inlined_call_operand.hbm [shape: bf16[128,128], index: 1, kind: input, shape index: {}]
  %s2 = inlined_call_operand.vmem [shape: f32[1,128], index: 2, kind: input, shape index: {}]
  %s3 = inlined_call_operand.hbm [shape: bf16[128,256], index: 3, kind: input, shape index: {}]
  %s4 = inlined_call_operand.vmem [shape: f32[1,256], index: 4, kind: input, shape index: {}]
  %s5 = inlined_call_operand.hbm [shape: f32[16,256], index: 5, kind: output, shape index: {}]
  %s6 = sld [smem:[#allocation0]]
  $region73: #{tpu_custom_call.1} parent=0
    _
  %s8 = ssub.s32 1, %s6
  %s9 = scalar_select 0, %s8, %s6
  $region1: #{tpu_custom_call.1} parent=0
    #allocation6 [shape = 'u8[4096]{0}', space=vmem, size = 0x1000, scoped, tag = 'input window, operand 0, single buffered']
    #allocation7 [shape = 's32[2]{0}', space=sflag, size = 0x8, scoped, tag = 'scoped memory for tpu_custom_call.1']
    #allocation8 [shape = 's32[2]{0}', space=sflag, size = 0x8, scoped, tag = 'scoped memory for tpu_custom_call.1']
    #allocation9 [shape = 'u8[32768]{0}', space=vmem, size = 0x8000, scoped, tag = 'input window, operand 1, single buffered']
    #allocation10 [shape = 's32[1]{0}', space=sflag, size = 0x4, scoped, tag = 'scoped memory for tpu_custom_call.1']
    #allocation11 [shape = 'u8[65536]{0}', space=vmem, size = 0x10000, scoped, tag = 'input window, operand 3']
    #allocation12 [shape = 'u8[16384]{0}', space=vmem, size = 0x4000, scoped, tag = 'output window, operand 0, single buffered']
    %10 = vsyncpa [#allocation7], 0
    %11 = vsyncpa [#allocation10], 0
    %12 = vsyncpa [#allocation8], 0
    loop: start=0, step=1, limit=4
    $region2: #{tpu_custom_call.1} parent=1 // loop_pre_header
      _
    $region3: #{tpu_custom_call.1} parent=1 // loop_header
      %s14 = sphi 0, %s18
      %p15 = scmp.ge.s32.totalorder %s14, 4
      %s21 = sphi 0, %s33
      %s22 = sphi 0, %s29
      %s23 = sphi 0, %s21
      %s24 = sphi 0, %s22
      %s25 = sphi 0, %s23
      %s26 = sphi 0, %s24
      %s36 = sphi 0, %s38
      %s39 = sphi 0, %s36
      %s40 = sphi 0, %s39
      %s56 = sphi 0, %s40
      %s60 = sphi 0, %s60
      %s62 = sphi 0, %s60
      %s63 = sphi 0, %s62
      %s77 = sphi 0, %s63
      %s81 = sphi 0, %s81
      %s83 = sphi 0, %s81
      %s84 = sphi 0, %s83
      %s98 = sphi 0, %s84
      %s104 = sphi 0, %s106
      %s107 = sphi 0, %s104
      %s108 = sphi 0, %s107
      %s124 = sphi 0, %s108
      %s130 = sphi 0, %s132
      %s133 = sphi 0, %s130
      %s134 = sphi 0, %s133
      %s150 = sphi 0, %s134
      %s156 = sphi 0, %s158
      %s159 = sphi 0, %s156
      %s160 = sphi 0, %s159
      %s176 = sphi 0, %s160
    $region4: #{tpu_custom_call.1} parent=1 // loop_header_branch
      %17 = sbr.rel (%p15) target = $region8
    $region5: #{tpu_custom_call.1} parent=1 // loop_body
      %s19 = ssub.s32 %s14, 1
      %s20 = ssub.s32 %s14, 2
      %s27 = sadd.s32 1, %s22
      %p28 = scmp.ge.s32.totalorder %s27, 2
      %s29 = scalar_select %p28, 0, %s27
      %s30 = sadd.s32 1, %s21
      %s31 = scalar_select %p28, %s30, %s21
      %p32 = scmp.ge.s32.totalorder %s31, 1
      %s33 = scalar_select %p32, 0, %s31
      %s34 = ssub.s32 %s21, %s33
      %p35 = scmp.eq.s32.totalorder %s34, 0
      %s37 = sadd.s32 %s36, 1
      %s38 = scalar_select %p35, %s36, %s37
      %p41 = pneg %p35
      %p42 = scmp.eq.s32.totalorder %s14, 1
      %p43 = por %p41, %p42
      %p44 = scmp.ne.s32.totalorder %s36, %s39
      %p45 = scmp.eq.s32.totalorder %s14, 0
      %p46 = por %p44, %p45
      %p47 = scmp.ne.s32.totalorder %s36, %s39
      %p48 = scmp.eq.s32.totalorder %s19, 1
      %p49 = por %p47, %p48
      %p50 = scmp.ne.s32.totalorder %s39, %s40
      %p51 = scmp.eq.s32.totalorder %s19, 0
      %p52 = por %p50, %p51
      %p53 = scmp.ne.s32.totalorder %s39, %s40
      %p54 = scmp.eq.s32.totalorder %s20, 1
      %p55 = por %p53, %p54
      %p57 = scmp.ne.s32.totalorder %s40, %s56
      %p58 = scmp.eq.s32.totalorder %s20, 0
      %p59 = por %p57, %p58
      %s61 = sadd.s32 %s60, 1
      %p64 = scmp.eq.s32.totalorder %s14, 1
      %p65 = scmp.ne.s32.totalorder %s60, %s62
      %p66 = scmp.eq.s32.totalorder %s14, 0
      %p67 = por %p65, %p66
      %p68 = scmp.ne.s32.totalorder %s60, %s62
      %p69 = scmp.eq.s32.totalorder %s19, 1
      %p70 = por %p68, %p69
      %p71 = scmp.ne.s32.totalorder %s62, %s63
      %p72 = scmp.eq.s32.totalorder %s19, 0
      %p73 = por %p71, %p72
      %p74 = scmp.ne.s32.totalorder %s62, %s63
      %p75 = scmp.eq.s32.totalorder %s20, 1
      %p76 = por %p74, %p75
      %p78 = scmp.ne.s32.totalorder %s63, %s77
      %p79 = scmp.eq.s32.totalorder %s20, 0
      %p80 = por %p78, %p79
      %s82 = sadd.s32 %s81, 1
      %p85 = scmp.eq.s32.totalorder %s14, 1
      %p86 = scmp.ne.s32.totalorder %s81, %s83
      %p87 = scmp.eq.s32.totalorder %s14, 0
      %p88 = por %p86, %p87
      %p89 = scmp.ne.s32.totalorder %s81, %s83
      %p90 = scmp.eq.s32.totalorder %s19, 1
      %p91 = por %p89, %p90
      %p92 = scmp.ne.s32.totalorder %s83, %s84
      %p93 = scmp.eq.s32.totalorder %s19, 0
      %p94 = por %p92, %p93
      %p95 = scmp.ne.s32.totalorder %s83, %s84
      %p96 = scmp.eq.s32.totalorder %s20, 1
      %p97 = por %p95, %p96
      %p99 = scmp.ne.s32.totalorder %s84, %s98
      %p100 = scmp.eq.s32.totalorder %s20, 0
      %p101 = por %p99, %p100
      %s102 = ssub.s32 %s22, %s29
      %p103 = scmp.eq.s32.totalorder %s102, 0
      %s105 = sadd.s32 %s104, 1
      %s106 = scalar_select %p103, %s104, %s105
      %p109 = pneg %p103
      %p110 = scmp.eq.s32.totalorder %s14, 1
      %p111 = por %p109, %p110
      %p112 = scmp.ne.s32.totalorder %s104, %s107
      %p113 = scmp.eq.s32.totalorder %s14, 0
      %p114 = por %p112, %p113
      %p115 = scmp.ne.s32.totalorder %s104, %s107
      %p116 = scmp.eq.s32.totalorder %s19, 1
      %p117 = por %p115, %p116
      %p118 = scmp.ne.s32.totalorder %s107, %s108
      %p119 = scmp.eq.s32.totalorder %s19, 0
      %p120 = por %p118, %p119
      %p121 = scmp.ne.s32.totalorder %s107, %s108
      %p122 = scmp.eq.s32.totalorder %s20, 1
      %p123 = por %p121, %p122
      %p125 = scmp.ne.s32.totalorder %s108, %s124
      %p126 = scmp.eq.s32.totalorder %s20, 0
      %p127 = por %p125, %p126
      %s128 = ssub.s32 %s22, %s29
      %p129 = scmp.eq.s32.totalorder %s128, 0
      %s131 = sadd.s32 %s130, 1
      %s132 = scalar_select %p129, %s130, %s131
      %p135 = pneg %p129
      %p136 = scmp.eq.s32.totalorder %s14, 1
      %p137 = por %p135, %p136
      %p138 = scmp.ne.s32.totalorder %s130, %s133
      %p139 = scmp.eq.s32.totalorder %s14, 0
      %p140 = por %p138, %p139
      %p141 = scmp.ne.s32.totalorder %s130, %s133
      %p142 = scmp.eq.s32.totalorder %s19, 1
      %p143 = por %p141, %p142
      %p144 = scmp.ne.s32.totalorder %s133, %s134
      %p145 = scmp.eq.s32.totalorder %s19, 0
      %p146 = por %p144, %p145
      %p147 = scmp.ne.s32.totalorder %s133, %s134
      %p148 = scmp.eq.s32.totalorder %s20, 1
      %p149 = por %p147, %p148
      %p151 = scmp.ne.s32.totalorder %s134, %s150
      %p152 = scmp.eq.s32.totalorder %s20, 0
      %p153 = por %p151, %p152
      %s154 = ssub.s32 %s21, %s33
      %p155 = scmp.eq.s32.totalorder %s154, 0
      %s157 = sadd.s32 %s156, 1
      %s158 = scalar_select %p155, %s156, %s157
      %p161 = pneg %p155
      %p162 = scmp.eq.s32.totalorder %s14, 1
      %p163 = por %p161, %p162
      %p164 = scmp.ne.s32.totalorder %s156, %s159
      %p165 = scmp.eq.s32.totalorder %s14, 0
      %p166 = por %p164, %p165
      %p167 = scmp.ne.s32.totalorder %s156, %s159
      %p168 = scmp.eq.s32.totalorder %s19, 1
      %p169 = por %p167, %p168
      %p170 = scmp.ne.s32.totalorder %s159, %s160
      %p171 = scmp.eq.s32.totalorder %s19, 0
      %p172 = por %p170, %p171
      %p173 = scmp.ne.s32.totalorder %s159, %s160
      %p174 = scmp.eq.s32.totalorder %s20, 1
      %p175 = por %p173, %p174
      %p177 = scmp.ne.s32.totalorder %s160, %s176
      %p178 = scmp.eq.s32.totalorder %s20, 0
      %p179 = por %p177, %p178
      %p180 = scmp.le.s32.totalorder 1, %s14
      %p181 = scmp.lt.s32.totalorder %s14, 3
      %p182 = pnand %p180, %p181
      %p183 = pneg %p182
      // Predicated region
      $region9: #{tpu_custom_call.1} parent=5 // pred_check
        _
      $region10: #{tpu_custom_call.1} parent=5 // pred_check_branch
        %185 = sbr.rel (%p182) target = $region12
      $region11: #{tpu_custom_call.1} parent=5 // pred_region
        %s186 = ssub.s32 %s14, 1
        // Predicated region
        $region13: #{tpu_custom_call.1} parent=11 // pred_check
          %p187 = pneg %p52
        $region14: #{tpu_custom_call.1} parent=11 // pred_check_branch
          %189 = sbr.rel (%p187) target = $region16
        $region15: #{tpu_custom_call.1} parent=11 // pred_region
          %s190 = smul.u32 2, %s23
          %s192 = ssub.s32 128, 128
          %193 = vsyncadd [#allocation7], %s192
          %s194 = smul.addr %s190, 64
          %s195 = scalar_lea.hbm %s0, %s194
          %s196 = sshll.u32 [#allocation6], 4
          %s197 = int_to_ptr.vmem [resolvable:$true] %s196
          %202 = dma.hbm_to_vmem [thread:$0]  %s195, 128, %s197, [#allocation7], 64, 64, 4
        $region16: #{tpu_custom_call.1} parent=11 // pred_fallthru
          _
        // Predicated region
        $region17: #{tpu_custom_call.1} parent=11 // pred_check
          %p203 = pneg %p73
        $region18: #{tpu_custom_call.1} parent=11 // pred_check_branch
          %205 = sbr.rel (%p203) target = $region20
        $region19: #{tpu_custom_call.1} parent=11 // pred_region
          %s207 = ssub.s32 1024, 1024
          %208 = vsyncadd [#allocation10], %s207
          %s209 = sshll.u32 [#allocation9], 4
          %s210 = int_to_ptr.vmem [resolvable:$true] %s209
          %215 = dma.hbm_to_vmem [thread:$0]  %s1, 1024, %s210, [#allocation10], 64, 64, 4
        $region20: #{tpu_custom_call.1} parent=11 // pred_fallthru
          _
        // Predicated region
        $region21: #{tpu_custom_call.1} parent=11 // pred_check
          %p216 = pneg %p94
        $region22: #{tpu_custom_call.1} parent=11 // pred_check_branch
          %218 = sbr.rel (%p216) target = $region24
        $region23: #{tpu_custom_call.1} parent=11 // pred_region
          _
        $region24: #{tpu_custom_call.1} parent=11 // pred_fallthru
          _
      $region12: #{tpu_custom_call.1} parent=5 // pred_fallthru
        _
      %p219 = scmp.lt.s32.totalorder %s14, 2
      // Predicated region
      $region25: #{tpu_custom_call.1} parent=5 // pred_check
        %p220 = pneg %p219
      $region26: #{tpu_custom_call.1} parent=5 // pred_check_branch
        %222 = sbr.rel (%p220) target = $region28
      $region27: #{tpu_custom_call.1} parent=5 // pred_region
        // Predicated region
        $region29: #{tpu_custom_call.1} parent=27 // pred_check
          %p223 = pneg %p114
        $region30: #{tpu_custom_call.1} parent=27 // pred_check_branch
          %225 = sbr.rel (%p223) target = $region32
        $region31: #{tpu_custom_call.1} parent=27 // pred_region
          %s226 = sand.u32 %s14, 1
          %s227 = scalar_lea.sflag [#allocation7], %s226
          %s228 = sand.u32 %s104, 1
          %s229 = smul.addr %s228, 64
          %s230 = scalar_lea.vmem [#allocation11], %s229
          %s232 = ssub.s32 1024, 1024
          %233 = vsyncadd %s227, %s232
          %s234 = smul.addr %s22, 64
          %s235 = scalar_lea.hbm %s3, %s234
          %s236 = sshll.u32 %s230, 4
          %s237 = int_to_ptr.vmem [resolvable:$true] %s236
          %242 = dma.hbm_to_vmem [thread:$0]  %s235, 1024, %s237, %s227, 128, 64, 4
        $region32: #{tpu_custom_call.1} parent=27 // pred_fallthru
          _
        // Predicated region
        $region33: #{tpu_custom_call.1} parent=27 // pred_check
          %p243 = pneg %p140
        $region34: #{tpu_custom_call.1} parent=27 // pred_check_branch
          %245 = sbr.rel (%p243) target = $region36
        $region35: #{tpu_custom_call.1} parent=27 // pred_region
          %p246 = scmp.lt.s32.totalorder %s22, 1
          %s247 = scalar_select %p246, %s22, 1
          %s248 = scalar_lea.vmem %s4, %s247
        $region36: #{tpu_custom_call.1} parent=27 // pred_fallthru
          _
      $region28: #{tpu_custom_call.1} parent=5 // pred_fallthru
        _
      %p249 = scmp.le.s32.totalorder 1, %s14
      %p250 = scmp.lt.s32.totalorder %s14, 3
      %p251 = pnand %p249, %p250
      %p252 = pneg %p251
      // Predicated region
      $region37: #{tpu_custom_call.1} parent=5 // pred_check
        _
      $region38: #{tpu_custom_call.1} parent=5 // pred_check_branch
        %254 = sbr.rel (%p251) target = $region40
      $region39: #{tpu_custom_call.1} parent=5 // pred_region
        %s255 = ssub.s32 %s14, 1
        // Predicated region
        $region41: #{tpu_custom_call.1} parent=39 // pred_check
          %p256 = pneg %p52
        $region42: #{tpu_custom_call.1} parent=39 // pred_check_branch
          %258 = sbr.rel (%p256) target = $region44
        $region43: #{tpu_custom_call.1} parent=39 // pred_region
          %259 = dma.done [#allocation7], 128
        $region44: #{tpu_custom_call.1} parent=39 // pred_fallthru
          _
        // Predicated region
        $region45: #{tpu_custom_call.1} parent=39 // pred_check
          %p260 = pneg %p73
        $region46: #{tpu_custom_call.1} parent=39 // pred_check_branch
          %262 = sbr.rel (%p260) target = $region48
        $region47: #{tpu_custom_call.1} parent=39 // pred_region
          %263 = dma.done [#allocation10], 1024
        $region48: #{tpu_custom_call.1} parent=39 // pred_fallthru
          _
        %s264 = sand.u32 %s19, 1
        %s265 = scalar_lea.sflag [#allocation7], %s264
        %s266 = sand.u32 %s107, 1
        %s267 = smul.addr %s266, 64
        %s268 = scalar_lea.vmem [#allocation11], %s267
        // Predicated region
        $region49: #{tpu_custom_call.1} parent=39 // pred_check
          %p269 = pneg %p120
        $region50: #{tpu_custom_call.1} parent=39 // pred_check_branch
          %271 = sbr.rel (%p269) target = $region52
        $region51: #{tpu_custom_call.1} parent=39 // pred_region
          %272 = dma.done %s265, 1024
        $region52: #{tpu_custom_call.1} parent=39 // pred_fallthru
          _
        %p273 = pneg %p52
        %p274 = pneg %p49
        %p275 = pneg %p73
        %p276 = pneg %p70
        %p277 = pneg %p94
        %p278 = pneg %p91
        %s279 = sand.u32 %s19, 1
        %s280 = scalar_lea.sflag [#allocation7], %s279
        %s281 = sand.u32 %s107, 1
        %s282 = smul.addr %s281, 64
        %s283 = scalar_lea.vmem [#allocation11], %s282
        %p284 = pneg %p120
        %p285 = pneg %p117
        %p286 = scmp.lt.s32.totalorder %s24, 1
        %s287 = scalar_select %p286, %s24, 1
        %s288 = scalar_lea.vmem %s4, %s287
        %p289 = pneg %p146
        %p290 = pneg %p143
        %p291 = pneg %p172
        %p292 = pneg %p169
        %s293 = smul.u32 2, %s23
        %p294 = scmp.lt.s32.totalorder %s24, 1
        %s295 = scalar_select %p294, %s24, 1
        %s296 = scalar_lea.vmem %s4, %s295
        %s297 = smul.u32 2, %s23
        %p299 = scmp.eq.s32.totalorder %s24, 0
        // Predicated region
        $region53: #{tpu_custom_call.1} parent=39 // pred_check
          %p300 = pneg %p299
        $region54: #{tpu_custom_call.1} parent=39 // pred_check_branch
          %302 = sbr.rel (%p300) target = $region56
        $region55: #{tpu_custom_call.1} parent=39 // pred_region
          %v303 = vld [vmem:[#allocation6] sm:$0xf]
          %v304 = vld [vmem:[#allocation6 + $0x4] sm:$0xf]
          %v305 = vld [vmem:[#allocation9] sm:$0xf]
          %v306 = vld [vmem:[#allocation9 + $0x4] sm:$0xf]
          %v307 = vld [vmem:[#allocation9 + $0x8] sm:$0xf]
          %v308 = vld [vmem:[#allocation9 + $0xc] sm:$0xf]
          %v309 = vld [vmem:[#allocation9 + $0x10] sm:$0xf]
          %v310 = vld [vmem:[#allocation9 + $0x14] sm:$0xf]
          %v311 = vld [vmem:[#allocation9 + $0x18] sm:$0xf]
          %v312 = vld [vmem:[#allocation9 + $0x1c] sm:$0xf]
          %v313 = vld [vmem:[#allocation9 + $0x20] sm:$0xf]
          %v314 = vld [vmem:[#allocation9 + $0x24] sm:$0xf]
          %v315 = vld [vmem:[#allocation9 + $0x28] sm:$0xf]
          %v316 = vld [vmem:[#allocation9 + $0x2c] sm:$0xf]
          %v317 = vld [vmem:[#allocation9 + $0x30] sm:$0xf]
          %v318 = vld [vmem:[#allocation9 + $0x34] sm:$0xf]
          %v319 = vld [vmem:[#allocation9 + $0x38] sm:$0xf]
          %v320 = vld [vmem:[#allocation9 + $0x3c] sm:$0xf]
          %v321 = vld [vmem:[%s2] sm:$0x1]
          %v323 = vlaneseq
          %v324 = vshrl.u32 %v323, 7
          %v325 = vsub.s32 0, %v324
          %v326 = vrot.slane %v321, %v325
          %v330 = vunpack.c.l.b16 %v303
          %v331 = vunpack.c.l.b16 %v304
          %v332 = vpack.c.b16 %v331, %v330
          %v350 = vunpack.c.l.b16 %v305
          %v351 = vunpack.c.l.b16 %v306
          %v352 = vunpack.c.l.b16 %v307
          %v353 = vunpack.c.l.b16 %v308
          %v354 = vunpack.c.l.b16 %v309
          %v355 = vunpack.c.l.b16 %v310
          %v356 = vunpack.c.l.b16 %v311
          %v357 = vunpack.c.l.b16 %v312
          %v358 = vunpack.c.l.b16 %v313
          %v359 = vunpack.c.l.b16 %v314
          %v360 = vunpack.c.l.b16 %v315
          %v361 = vunpack.c.l.b16 %v316
          %v362 = vunpack.c.l.b16 %v317
          %v363 = vunpack.c.l.b16 %v318
          %v364 = vunpack.c.l.b16 %v319
          %v365 = vunpack.c.l.b16 %v320
          %v366 = vpack.c.b16 %v351, %v350
          %v367 = vpack.c.b16 %v353, %v352
          %v368 = vpack.c.b16 %v355, %v354
          %v369 = vpack.c.b16 %v357, %v356
          %v370 = vpack.c.b16 %v359, %v358
          %v371 = vpack.c.b16 %v361, %v360
          %v372 = vpack.c.b16 %v363, %v362
          %v373 = vpack.c.b16 %v365, %v364
          %382 = vmatprep.subr.bf16.mxu0 0
          %383 = vmatpush1.bf16.msra.mxu0 %v366
          %384 = vmatprep.subr.bf16.mxu0 0
          %385 = vmatpush1.bf16.msra.mxu0 %v367
          %386 = vmatprep.subr.bf16.mxu0 0
          %387 = vmatpush1.bf16.msra.mxu0 %v368
          %388 = vmatprep.subr.bf16.mxu0 0
          %389 = vmatpush1.bf16.msra.mxu0 %v369
          %390 = vmatprep.subr.bf16.mxu0 0
          %391 = vmatpush1.bf16.msra.mxu0 %v370
          %392 = vmatprep.subr.bf16.mxu0 0
          %393 = vmatpush1.bf16.msra.mxu0 %v371
          %394 = vmatprep.subr.bf16.mxu0 0
          %395 = vmatpush1.bf16.msra.mxu0 %v372
          %396 = vmatprep.subr.bf16.mxu0 0
          %397 = vmatpush1.bf16.msra.mxu0 %v373
          %398 = vmatprep.subr.bf16.mxu0 0
          %399 = vmatpush1.bf16.msra.mxu0 0
          %400 = vmatprep.subr.bf16.mxu0 0
          %401 = vmatpush1.bf16.msra.mxu0 0
          %402 = vmatprep.subr.bf16.mxu0 0
          %403 = vmatpush1.bf16.msra.mxu0 0
          %404 = vmatprep.subr.bf16.mxu0 0
          %405 = vmatpush1.bf16.msra.mxu0 0
          %406 = vmatprep.subr.bf16.mxu0 0
          %407 = vmatpush1.bf16.msra.mxu0 0
          %408 = vmatprep.subr.bf16.mxu0 0
          %409 = vmatpush1.bf16.msra.mxu0 0
          %410 = vmatprep.subr.bf16.mxu0 0
          %411 = vmatpush1.bf16.msra.mxu0 0
          %412 = vmatprep.subr.bf16.mxu0 0
          %413 = vmatpush1.bf16.msra.mxu0 0
          %414 = vmatprep.mubr.bf16.mxu0 0
          %415 = vmatmul.mubr.bf16.gmra.mrb[0].mxu0 %v332
          %v416 = vpop.f32.mrb[0].mxu0
          %v417 = vadd.f32 %v326, %v416
          %v418 = vpop.f32.mrb[0].mxu0
          %v419 = vpop.f32.mrb[0].mxu0
          %v420 = vadd.f32 %v326, %v419
          %v421 = vpop.f32.mrb[0].mxu0
          %422 = vdwg.mxu0
          %v423 = vmax.f32 %v417, 0.0
          %v424 = vmax.f32 %v420, 0.0
          %v425 = vpack.c.bf16 %v424, %v423
          %426 = vst [vmem:[#allocation2] sm:$0xff] %v425
          %vm427 = vcmask 7168
          %428 = vst.msk [vmem:[#allocation3] sm:$0xff] %vm427, -inf
          %429 = vst.msk [vmem:[#allocation3 + $0x8] sm:$0xff] %vm427, -inf
          %430 = vst.msk [vmem:[#allocation4] sm:$0xff] %vm427, 0.0
          %431 = vst.msk [vmem:[#allocation4 + $0x8] sm:$0xff] %vm427, 0.0
        $region56: #{tpu_custom_call.1} parent=39 // pred_fallthru
          _
        %v432 = vld [vmem:[#allocation2] sm:$0xff]
        %v433 = vld [vmem:[%s268] sm:$0xf]
        %v434 = vld [vmem:[%s268 + $0x4] sm:$0xf]
        %v435 = vld [vmem:[%s268 + $0x8] sm:$0xf]
        %v436 = vld [vmem:[%s268 + $0xc] sm:$0xf]
        %v437 = vld [vmem:[%s268 + $0x10] sm:$0xf]
        %v438 = vld [vmem:[%s268 + $0x14] sm:$0xf]
        %v439 = vld [vmem:[%s268 + $0x18] sm:$0xf]
        %v440 = vld [vmem:[%s268 + $0x1c] sm:$0xf]
        %v441 = vld [vmem:[%s268 + $0x20] sm:$0xf]
        %v442 = vld [vmem:[%s268 + $0x24] sm:$0xf]
        %v443 = vld [vmem:[%s268 + $0x28] sm:$0xf]
        %v444 = vld [vmem:[%s268 + $0x2c] sm:$0xf]
        %v445 = vld [vmem:[%s268 + $0x30] sm:$0xf]
        %v446 = vld [vmem:[%s268 + $0x34] sm:$0xf]
        %v447 = vld [vmem:[%s268 + $0x38] sm:$0xf]
        %v448 = vld [vmem:[%s268 + $0x3c] sm:$0xf]
        %v449 = vld [vmem:[%s296] sm:$0x1]
        %v451 = vlaneseq
        %v452 = vshrl.u32 %v451, 7
        %v453 = vsub.s32 0, %v452
        %v454 = vrot.slane %v449, %v453
        %v472 = vunpack.c.l.b16 %v433
        %v473 = vunpack.c.l.b16 %v434
        %v474 = vunpack.c.l.b16 %v435
        %v475 = vunpack.c.l.b16 %v436
        %v476 = vunpack.c.l.b16 %v437
        %v477 = vunpack.c.l.b16 %v438
        %v478 = vunpack.c.l.b16 %v439
        %v479 = vunpack.c.l.b16 %v440
        %v480 = vunpack.c.l.b16 %v441
        %v481 = vunpack.c.l.b16 %v442
        %v482 = vunpack.c.l.b16 %v443
        %v483 = vunpack.c.l.b16 %v444
        %v484 = vunpack.c.l.b16 %v445
        %v485 = vunpack.c.l.b16 %v446
        %v486 = vunpack.c.l.b16 %v447
        %v487 = vunpack.c.l.b16 %v448
        %v488 = vpack.c.b16 %v473, %v472
        %v489 = vpack.c.b16 %v475, %v474
        %v490 = vpack.c.b16 %v477, %v476
        %v491 = vpack.c.b16 %v479, %v478
        %v492 = vpack.c.b16 %v481, %v480
        %v493 = vpack.c.b16 %v483, %v482
        %v494 = vpack.c.b16 %v485, %v484
        %v495 = vpack.c.b16 %v487, %v486
        %504 = vmatprep.subr.bf16.mxu0 0
        %505 = vmatpush1.bf16.msra.mxu0 %v488
        %506 = vmatprep.subr.bf16.mxu0 0
        %507 = vmatpush1.bf16.msra.mxu0 %v489
        %508 = vmatprep.subr.bf16.mxu0 0
        %509 = vmatpush1.bf16.msra.mxu0 %v490
        %510 = vmatprep.subr.bf16.mxu0 0
        %511 = vmatpush1.bf16.msra.mxu0 %v491
        %512 = vmatprep.subr.bf16.mxu0 0
        %513 = vmatpush1.bf16.msra.mxu0 %v492
        %514 = vmatprep.subr.bf16.mxu0 0
        %515 = vmatpush1.bf16.msra.mxu0 %v493
        %516 = vmatprep.subr.bf16.mxu0 0
        %517 = vmatpush1.bf16.msra.mxu0 %v494
        %518 = vmatprep.subr.bf16.mxu0 0
        %519 = vmatpush1.bf16.msra.mxu0 %v495
        %520 = vmatprep.subr.bf16.mxu0 0
        %521 = vmatpush1.bf16.msra.mxu0 0
        %522 = vmatprep.subr.bf16.mxu0 0
        %523 = vmatpush1.bf16.msra.mxu0 0
        %524 = vmatprep.subr.bf16.mxu0 0
        %525 = vmatpush1.bf16.msra.mxu0 0
        %526 = vmatprep.subr.bf16.mxu0 0
        %527 = vmatpush1.bf16.msra.mxu0 0
        %528 = vmatprep.subr.bf16.mxu0 0
        %529 = vmatpush1.bf16.msra.mxu0 0
        %530 = vmatprep.subr.bf16.mxu0 0
        %531 = vmatpush1.bf16.msra.mxu0 0
        %532 = vmatprep.subr.bf16.mxu0 0
        %533 = vmatpush1.bf16.msra.mxu0 0
        %534 = vmatprep.subr.bf16.mxu0 0
        %535 = vmatpush1.bf16.msra.mxu0 0
        %536 = vmatprep.mubr.bf16.mxu0 0
        %537 = vmatmul.mubr.bf16.gmra.mrb[0].mxu0 %v432
        %v538 = vpop.f32.mrb[0].mxu0
        %v539 = vadd.f32 %v454, %v538
        %v540 = vpop.f32.mrb[0].mxu0
        %v541 = vpop.f32.mrb[0].mxu0
        %v542 = vadd.f32 %v454, %v541
        %v543 = vpop.f32.mrb[0].mxu0
        %544 = vdwg.mxu0
        %s545 = smul.u32 %s24, 16
        %s546 = scalar_lea.vmem [#allocation5], %s545
        %547 = vst [vmem:[%s546] sm:$0xff] %v539
        %548 = vst [vmem:[%s546 + $0x8] sm:$0xff] %v542
        %v549 = vld [vmem:[#allocation3] sm:$0xff]
        %v550 = vld [vmem:[#allocation3 + $0x8] sm:$0xff]
        %551 = vmax.xlane.f32.xlu0 %v539
        %v552 = vpop.xlane.xlu0 %551
        %553 = vmax.xlane.f32.xlu0 %v542
        %v554 = vpop.xlane.xlu0 %553
        %v555 = vmax.f32 %v549, %v552
        %v556 = vmax.f32 %v550, %v554
        %v557 = vld [vmem:[#allocation4] sm:$0xff]
        %v558 = vld [vmem:[#allocation4 + $0x8] sm:$0xff]
        %v559 = vsub.f32 %v549, %v555
        %v560 = vsub.f32 %v550, %v556
        %v561 = vmul.f32 %v559, 1.442695
        %v562 = vpow.pop %v561
        %v563 = vmul.f32 %v560, 1.442695
        %v564 = vpow.pop %v563
        %v565 = vmul.f32 %v557, %v562
        %v566 = vmul.f32 %v558, %v564
        %568 = vset.pattern.permute.xlu0 0
        %569 = vperm.xlu0 %568, %v555
        %v570 = vpop.permute.xlu0 %569
        %573 = vset.pattern.permute.xlu0 0
        %574 = vperm.xlu0 %573, %v556
        %v575 = vpop.permute.xlu0 %574
        %v577 = vsub.f32 %v539, %v570
        %v578 = vsub.f32 %v542, %v575
        %v579 = vmul.f32 %v577, 1.442695
        %v580 = vpow.pop %v579
        %v581 = vmul.f32 %v578, 1.442695
        %v582 = vpow.pop %v581
        %583 = vadd.xlane.f32.xlu0 %v580
        %v584 = vpop.xlane.xlu0 %583
        %585 = vadd.xlane.f32.xlu0 %v582
        %v586 = vpop.xlane.xlu0 %585
        %v587 = vadd.f32 %v565, %v584
        %v588 = vadd.f32 %v566, %v586
        %vm589 = vcmask 7168
        %590 = vst.msk [vmem:[#allocation4] sm:$0xff] %vm589, %v587
        %591 = vst.msk [vmem:[#allocation4 + $0x8] sm:$0xff] %vm589, %v588
        %592 = vst.msk [vmem:[#allocation3] sm:$0xff] %vm589, %v555
        %593 = vst.msk [vmem:[#allocation3 + $0x8] sm:$0xff] %vm589, %v556
        %p594 = scmp.eq.s32.totalorder %s24, 1
        // Predicated region
        $region57: #{tpu_custom_call.1} parent=39 // pred_check
          %p595 = pneg %p594
        $region58: #{tpu_custom_call.1} parent=39 // pred_check_branch
          %597 = sbr.rel (%p595) target = $region60
        $region59: #{tpu_custom_call.1} parent=39 // pred_region
          %v598 = vld [vmem:[#allocation3] sm:$0xff]
          %v599 = vld [vmem:[#allocation3 + $0x8] sm:$0xff]
          %v600 = vld [vmem:[#allocation4] sm:$0xff]
          %v601 = vld [vmem:[#allocation4 + $0x8] sm:$0xff]
          %v602 = vlog2.pop %v600
          %v603 = vmul.f32 %v602, 0.6931472
          %v604 = vlog2.pop %v601
          %v605 = vmul.f32 %v604, 0.6931472
          %v606 = vadd.f32 %v598, %v603
          %v607 = vadd.f32 %v599, %v605
          %v608 = vld [vmem:[#allocation5] sm:$0xff]
          %v609 = vld [vmem:[#allocation5 + $0x8] sm:$0xff]
          %611 = vset.pattern.permute.xlu0 0
          %612 = vperm.xlu0 %611, %v606
          %v613 = vpop.permute.xlu0 %612
          %616 = vset.pattern.permute.xlu0 0
          %617 = vperm.xlu0 %616, %v607
          %v618 = vpop.permute.xlu0 %617
          %v620 = vsub.f32 %v608, %v613
          %v621 = vsub.f32 %v609, %v618
          %622 = vst [vmem:[#allocation12] sm:$0xff] %v620
          %623 = vst [vmem:[#allocation12 + $0x10] sm:$0xff] %v621
          %s624 = scalar_lea.vmem [#allocation5], 16
          %v625 = vld [vmem:[%s624] sm:$0xff]
          %v626 = vld [vmem:[%s624 + $0x8] sm:$0xff]
          %v627 = vsub.f32 %v625, %v613
          %v628 = vsub.f32 %v626, %v618
          %629 = vst [vmem:[#allocation12 + $0x8] sm:$0xff] %v627
          %630 = vst [vmem:[#allocation12 + $0x18] sm:$0xff] %v628
        $region60: #{tpu_custom_call.1} parent=39 // pred_fallthru
          _
        // Predicated region
        $region61: #{tpu_custom_call.1} parent=39 // pred_check
          %p631 = pneg %p169
        $region62: #{tpu_custom_call.1} parent=39 // pred_check_branch
          %633 = sbr.rel (%p631) target = $region64
        $region63: #{tpu_custom_call.1} parent=39 // pred_region
          %s634 = smul.u32 2, %s23
          %s636 = ssub.s32 512, 512
          %637 = vsyncadd [#allocation8], %s636
          %s638 = smul.addr %s634, 2
          %s639 = smul.addr %s638, 128
          %s640 = scalar_lea.hbm %s5, %s639
          %s641 = sshll.u32 [#allocation12], 4
          %s642 = int_to_ptr.vmem [resolvable:$true] %s641
          %647 = dma.vmem_to_hbm [thread:$0]  %s642, 512, %s640, [#allocation8], 256, 256, 16
        $region64: #{tpu_custom_call.1} parent=39 // pred_fallthru
          _
        // Predicated region
        $region65: #{tpu_custom_call.1} parent=39 // pred_check
          %p648 = pneg %p169
        $region66: #{tpu_custom_call.1} parent=39 // pred_check_branch
          %650 = sbr.rel (%p648) target = $region68
        $region67: #{tpu_custom_call.1} parent=39 // pred_region
          %651 = dma.done [#allocation8], 512
        $region68: #{tpu_custom_call.1} parent=39 // pred_fallthru
          _
      $region40: #{tpu_custom_call.1} parent=5 // pred_fallthru
        _
      %p652 = scmp.le.s32.totalorder 2, %s14
      // Predicated region
      $region69: #{tpu_custom_call.1} parent=5 // pred_check
        %p653 = pneg %p652
      $region70: #{tpu_custom_call.1} parent=5 // pred_check_branch
        %655 = sbr.rel (%p653) target = $region72
      $region71: #{tpu_custom_call.1} parent=5 // pred_region
        %s656 = ssub.s32 %s14, 2
      $region72: #{tpu_custom_call.1} parent=5 // pred_fallthru
        _
    $region6: #{tpu_custom_call.1} parent=1 // loop_footer
      %s18 = sadd.s32 1, %s14
    $region7: #{tpu_custom_call.1} parent=1 // loop_footer_branch
      %13 = sbr.rel target = $region3
    $region8: #{tpu_custom_call.1} parent=1 // loop_exit
      _
    %657 = vsyncpa [#allocation7], 1
    %s658 = scalar_lea.sflag [#allocation7], 1
    %659 = vsyncpa %s658, 1
    %660 = vsyncpa [#allocation10], 1
    %661 = vsyncpa [#allocation8], 1
    %s662 = scalar_lea.sflag [#allocation8], 1
    %663 = vsyncpa %s662, 1

</llo_original>
